<compile_context>
chip_gen: v7x
topology: tpu7x:2x2x1
jax: 0.10.0
libtpu: 0.0.40
codegen_flags: <defaults>
</compile_context>

<pallas_src>
import functools

import jax
import jax.numpy as jnp
import numpy as np
from jax.experimental import pallas as pl
from jax.experimental.pallas import tpu as pltpu

_LANE = 128
_HINT_BLOCK_ROWS = 1024      # (rows,128) f32 rows per hint tensor per grid step (~0.5 MiB)

# 8-row-aligned piece offsets inside the stacked RPN input
_RPN_LOC_OFF, _RPN_GT_OFF, _RPN_SCORE_OFF, _RPN_LABEL_OFF = 0, 8, 16, 24


def _round_up(x, m):
    return ((x + m - 1) // m) * m


def _cdiv(a, b):
    return -(-a // b)


def _roi_row_offsets(n_class):
    """Row offsets of the 8-aligned pieces inside the stacked ROI input."""
    gt_off = _round_up(4 * n_class, 8)
    score_off = gt_off + 8
    gts_off = score_off + _round_up(n_class, 8)
    label_off = gts_off + 8
    return gt_off, score_off, gts_off, label_off


# ---------------------------------------------------------------------------
# In-kernel helpers (all produce (1,1) f32 values)
# ---------------------------------------------------------------------------
def _ssum(x):
    return jnp.sum(x).reshape(1, 1)


def _smooth_l1_sum(diff, sigma):
    """sum of smooth-L1(diff); diff is already in_weight-masked (zeros contribute 0)."""
    sigma2 = sigma * sigma
    abs_diff = jnp.abs(diff)
    y = jnp.where(abs_diff < (1.0 / sigma2),
                  (sigma2 / 2.0) * diff * diff,
                  abs_diff - 0.5 / sigma2)
    return _ssum(y)


# ---------------------------------------------------------------------------
# Fused loss kernel (grid = hint row-blocks; losses finalized on last step)
# ---------------------------------------------------------------------------
def _fused_loss_kernel(rpn_ref, roi_ref, hint4_ref, hint5_ref, out_ref,
                       d4_acc, d5_acc, *,
                       rpn_sigma, roi_sigma, n_class, roi_offsets,
                       n4, n5, n_sample):
    f32 = jnp.float32
    g = pl.program_id(0)
    last = pl.num_programs(0) - 1

    # ---- hint partial sums: d = sum(student_block) - sum(teacher_block) ----
    @pl.when(g == 0)
    def _():
        d4_acc[...] = jnp.zeros_like(d4_acc)
        d5_acc[...] = jnp.zeros_like(d5_acc)

    d4_acc[...] += jnp.sum(hint4_ref[0, :, :] - hint4_ref[1, :, :], keepdims=True)
    d5_acc[...] += jnp.sum(hint5_ref[0, :, :] - hint5_ref[1, :, :], keepdims=True)

    # ---- all loss math runs once, on the final grid step -------------------
    @pl.when(g == last)
    def _():
        # -------------------- RPN losses ------------------------------------
        rpn_loc_t = rpn_ref[_RPN_LOC_OFF:_RPN_LOC_OFF + 4, :]          # (4, A)
        gt_rpn_loc_t = rpn_ref[_RPN_GT_OFF:_RPN_GT_OFF + 4, :]         # (4, A)
        l0 = rpn_ref[_RPN_SCORE_OFF:_RPN_SCORE_OFF + 1, :]             # (1, A)
        l1 = rpn_ref[_RPN_SCORE_OFF + 1:_RPN_SCORE_OFF + 2, :]         # (1, A)
        rpn_label = rpn_ref[_RPN_LABEL_OFF:_RPN_LABEL_OFF + 1, :].astype(jnp.int32)

        rpn_in_w = (rpn_label > 0).astype(f32)
        rpn_diff = rpn_in_w * (rpn_loc_t - gt_rpn_loc_t)
        rpn_norm = _ssum((rpn_label >= 0).astype(f32))
        # NOTE: zero valid labels -> divide-by-zero, mirroring the PyTorch reference.
        rpn_loc_loss = _smooth_l1_sum(rpn_diff, rpn_sigma) / rpn_norm

        # binary cross-entropy with ignore_index = -1 (2-class fast path)
        m2 = jnp.maximum(l0, l1)
        lse2 = m2 + jnp.log(jnp.exp(l0 - m2) + jnp.exp(l1 - m2))
        picked2 = jnp.where(rpn_label == 1, l1, l0)
        rpn_valid = (rpn_label != -1).astype(f32)
        rpn_cls_loss = _ssum((lse2 - picked2) * rpn_valid) / _ssum(rpn_valid)

        # -------------------- ROI losses ------------------------------------
        gt_off, score_off, gts_off, label_off = roi_offsets
        c4 = 4 * n_class
        roi_cls_loc_t = roi_ref[0:c4, :]                               # (4C, N)
        gt_roi_loc_t = roi_ref[gt_off:gt_off + 4, :]                   # (4, N)
        roi_score_t = roi_ref[score_off:score_off + n_class, :]        # (C, N)
        gt_roi_score = roi_ref[gts_off:gts_off + 1, :]                 # (1, N)
        roi_label = roi_ref[label_off:label_off + 1, :].astype(jnp.int32)

        roi_in_w = (roi_label > 0).astype(f32)
        roi_valid = (roi_label != -100).astype(f32)
        roi_norm = _ssum((roi_label >= 0).astype(f32))

        # per-class loc gather fused into ONE masked smooth-L1 reduction:
        # keep rows 4*label .. 4*label+3, subtract gt[coord = row & 3].
        row_iota = jax.lax.broadcasted_iota(jnp.int32, roi_cls_loc_t.shape, 0)
        lab4 = roi_label * 4
        pick = jnp.logical_and(row_iota >= lab4, row_iota < lab4 + 4).astype(f32)
        k_iota = row_iota & 3
        gt_full = jnp.where(k_iota == 0, gt_roi_loc_t[0:1, :],
                            jnp.where(k_iota == 1, gt_roi_loc_t[1:2, :],
                                      jnp.where(k_iota == 2, gt_roi_loc_t[2:3, :],
                                                gt_roi_loc_t[3:4, :])))
        roi_diff = pick * roi_in_w * (roi_cls_loc_t - gt_full)
        roi_loc_loss = _smooth_l1_sum(roi_diff, roi_sigma) / roi_norm

        # ROI cross-entropy (ignore_index = -100), shares max / sum_e with scores_loss
        m = jnp.max(roi_score_t, axis=0, keepdims=True)                # (1, N)
        sum_e = jnp.sum(jnp.exp(roi_score_t - m), axis=0, keepdims=True)
        lse = m + jnp.log(sum_e)
        cls_iota = jax.lax.broadcasted_iota(jnp.int32, roi_score_t.shape, 0)
        safe_label = jnp.where(roi_label == -100, 0, roi_label)
        picked = jnp.sum((cls_iota == safe_label).astype(f32) * roi_score_t,
                         axis=0, keepdims=True)
        roi_cls_loss = _ssum((lse - picked) * roi_valid) / _ssum(roi_valid)

        # scores_loss = L1( max(softmax(roi_score)), gt_roi_score )
        # max(softmax(x)) = 1 / sum(exp(x - max)); approx recip rides the EUP slot.
        p_max = pl.reciprocal(sum_e, approx=True)
        scores_loss = _ssum(jnp.abs(p_max - gt_roi_score) * roi_valid) / n_sample

        # -------------------- hint loss --------------------------------------
        d4 = d4_acc[...] / n4
        d5 = d5_acc[...] / n5
        hint_loss = d4 * d4 / n4 + d5 * d5 / n5

        total_loss = (rpn_loc_loss + rpn_cls_loss + roi_loc_loss + roi_cls_loss
                      + hint_loss + scores_loss)

        # pack the 7 scalars into one lane-dense (1,128) output row (vsel only)
        lane = jax.lax.broadcasted_iota(jnp.int32, (1, _LANE), 1)
        packed = jnp.zeros((1, _LANE), f32)
        for i, v in enumerate((rpn_loc_loss, rpn_cls_loss, roi_loc_loss,
                               roi_cls_loss, hint_loss, scores_loss, total_loss)):
            packed = jnp.where(lane == i, v, packed)
        out_ref[...] = packed


# ---------------------------------------------------------------------------
# Wrapper: layout plumbing (stacking / padding) + single pallas_call
# ---------------------------------------------------------------------------
def _pad_lanes(x, width, value=0.0):
    pad = width - x.shape[-1]
    if pad == 0:
        return x
    return jnp.pad(x, ((0, 0), (0, pad)), constant_values=value)


def _pad_piece(x):
    """Pad rows up to a multiple of 8 so every piece starts sublane-aligned."""
    pad = _round_up(x.shape[0], 8) - x.shape[0]
    if pad == 0:
        return x
    return jnp.pad(x, ((0, pad), (0, 0)))


def _pad_rows(x, rows):
    pad = rows - x.shape[0]
    if pad == 0:
        return x
    return jnp.pad(x, ((0, pad), (0, 0)))


def _lane_rows(x):
    """Flatten any-rank array into lane-dense (rows, 128) f32 (zero padded)."""
    n = int(np.prod(x.shape))
    rows = _cdiv(n, _LANE)
    flat = jnp.pad(x.reshape(-1).astype(jnp.float32), (0, rows * _LANE - n))
    return flat.reshape(rows, _LANE), n


def faster_rcnn_trainer_forward(rpn_loc, rpn_score, gt_rpn_loc, gt_rpn_label,
                                roi_cls_loc, roi_score, gt_roi_loc, gt_roi_label,
                                gt_roi_score, st_stage4, teacher_stage4,
                                st_stage5, teacher_stage5,
                                rpn_sigma=3.0, roi_sigma=1.0):
    f32 = jnp.float32
    n_anchor = rpn_loc.shape[0]
    n_sample, n_class = roi_score.shape
    a_pad = _round_up(n_anchor, _LANE)
    n_pad = _round_up(n_sample, _LANE)

    # ---- one coord/class-major f32 slab per head (one DMA each) ------------
    rpn_stack = jnp.concatenate([
        _pad_piece(_pad_lanes(rpn_loc.astype(f32).T, a_pad)),                    # rows 0..3
        _pad_piece(_pad_lanes(gt_rpn_loc.astype(f32).T, a_pad)),                 # rows 8..11
        _pad_piece(_pad_lanes(rpn_score.astype(f32).T, a_pad)),                  # rows 16..17
        _pad_piece(_pad_lanes(gt_rpn_label.reshape(1, -1).astype(f32), a_pad,
                              value=-1.0)),                                      # row 24
    ], axis=0)                                                                   # (32, A_pad)

    roi_stack = jnp.concatenate([
        _pad_piece(_pad_lanes(roi_cls_loc.astype(f32).T, n_pad)),                # rows 0..4C-1
        _pad_piece(_pad_lanes(gt_roi_loc.astype(f32).T, n_pad)),
        _pad_piece(_pad_lanes(roi_score.astype(f32).T, n_pad)),
        _pad_piece(_pad_lanes(gt_roi_score.reshape(1, -1).astype(f32), n_pad)),
        _pad_piece(_pad_lanes(gt_roi_label.reshape(1, -1).astype(f32), n_pad,
                              value=-100.0)),
    ], axis=0)                                                                   # (136, N_pad) for C=21
    roi_offsets = _roi_row_offsets(n_class)

    # ---- hint maps: lane-dense, student/teacher stacked, grid-tiled ---------
    s4_r, n4 = _lane_rows(st_stage4)
    t4_r, _ = _lane_rows(teacher_stage4)
    s5_r, n5 = _lane_rows(st_stage5)
    t5_r, _ = _lane_rows(teacher_stage5)

    num_steps = max(1, _cdiv(max(s4_r.shape[0], s5_r.shape[0]), _HINT_BLOCK_ROWS))
    blk4 = _round_up(_cdiv(s4_r.shape[0], num_steps), 8)
    blk5 = _round_up(_cdiv(s5_r.shape[0], num_steps), 8)
    hint4 = jnp.stack([_pad_rows(s4_r, num_steps * blk4),
                       _pad_rows(t4_r, num_steps * blk4)])                       # (2, G*blk4, 128)
    hint5 = jnp.stack([_pad_rows(s5_r, num_steps * blk5),
                       _pad_rows(t5_r, num_steps * blk5)])                       # (2, G*blk5, 128)

    kernel = functools.partial(
        _fused_loss_kernel,
        rpn_sigma=float(rpn_sigma), roi_sigma=float(roi_sigma),
        n_class=int(n_class), roi_offsets=roi_offsets,
        n4=float(n4), n5=float(n5), n_sample=float(n_sample))

    grid_spec = pltpu.PrefetchScalarGridSpec(
        num_scalar_prefetch=0,
        grid=(num_steps,),
        in_specs=[
            pl.BlockSpec(rpn_stack.shape, lambda g: (0, 0)),      # resident across grid
            pl.BlockSpec(roi_stack.shape, lambda g: (0, 0)),      # resident across grid
            pl.BlockSpec((2, blk4, _LANE), lambda g: (0, g, 0)),  # hint row-blocks
            pl.BlockSpec((2, blk5, _LANE), lambda g: (0, g, 0)),
        ],
        out_specs=pl.BlockSpec((1, _LANE), lambda g: (0, 0)),
        scratch_shapes=[pltpu.VMEM((1, 1), jnp.float32),          # d4 accumulator
                        pltpu.VMEM((1, 1), jnp.float32)],         # d5 accumulator
    )

    packed = pl.pallas_call(
        kernel,
        out_shape=jax.ShapeDtypeStruct((1, _LANE), jnp.float32),
        grid_spec=grid_spec,
        compiler_params=pltpu.CompilerParams(
            dimension_semantics=("arbitrary",),          # hint-reduction axis carries accs
            vmem_limit_bytes=32 * 1024 * 1024),
    )(rpn_stack, roi_stack, hint4, hint5)

    row = packed[0]
    # (rpn_loc_loss, rpn_cls_loss, roi_loc_loss, roi_cls_loss, hint, scores, total)
    return tuple(row[i] for i in range(7))


# ---------------------------------------------------------------------------
# Pure-JAX reference (for correctness check)
# ---------------------------------------------------------------------------
def _ref_forward(rpn_loc, rpn_score, gt_rpn_loc, gt_rpn_label, roi_cls_loc, roi_score,
                 gt_roi_loc, gt_roi_label, gt_roi_score, s4, t4, s5, t5,
                 rpn_sigma=3.0, roi_sigma=1.0):
    def loc_loss(p, g, lab, sigma):
        s2 = sigma ** 2
        w = (lab > 0).astype(jnp.float32)[:, None]
        d = w * (p - g)
        ad = jnp.abs(d)
        fl = (ad < 1.0 / s2).astype(jnp.float32)
        y = fl * (s2 / 2.0) * d * d + (1 - fl) * (ad - 0.5 / s2)
        return jnp.sum(y) / jnp.sum((lab >= 0).astype(jnp.float32))

    def ce(lg, lab, ig):
        valid = lab != ig
        safe = jnp.where(valid, lab, 0)
        lse = jax.scipy.special.logsumexp(lg, axis=1)
        picked = jnp.take_along_axis(lg, safe[:, None], axis=1)[:, 0]
        nll = (lse - picked) * valid.astype(jnp.float32)
        return jnp.sum(nll) / jnp.sum(valid.astype(jnp.float32))

    def l2s(gt, pr):
        return (jnp.mean(gt) - jnp.mean(pr)) ** 2 / gt.size

    p = jax.nn.softmax(roi_score, axis=1)
    scores_loss = jnp.mean(jnp.abs(jnp.max(p, axis=1) - gt_roi_score))
    rll = loc_loss(rpn_loc, gt_rpn_loc, gt_rpn_label, rpn_sigma)
    rcl = ce(rpn_score, gt_rpn_label, -1)
    n = roi_cls_loc.shape[0]
    rl = roi_cls_loc.reshape(n, -1, 4)[jnp.arange(n), gt_roi_label]
    oll = loc_loss(rl, gt_roi_loc, gt_roi_label, roi_sigma)
    ocl = ce(roi_score, gt_roi_label, -100)
    hint = l2s(s4, t4) + l2s(s5, t5)
    ls = [rll, rcl, oll, ocl, hint, scores_loss]
    return tuple(ls) + (sum(ls),)


if __name__ == "__main__":
    key = jax.random.PRNGKey(0)
    ks = jax.random.split(key, 16)

    # img (1, 3, 64, 64) -> feature map 4x4 (stride 16) -> 4*4*9 = 144 anchors
    H = W = 64
    n_anchor = (H // 16) * (W // 16) * 9          # 144
    n_sample = 128                                # ROIs sampled by ProposalTargetCreator
    n_class = 21                                  # 20 fg + background

    rpn_loc = 0.1 * jax.random.normal(ks[0], (n_anchor, 4), jnp.float32)
    rpn_score = jax.random.normal(ks[1], (n_anchor, 2), jnp.float32)
    gt_rpn_loc = 0.1 * jax.random.normal(ks[2], (n_anchor, 4), jnp.float32)
    gt_rpn_label = jax.random.randint(ks[3], (n_anchor,), -1, 2, jnp.int32)   # {-1,0,1}

    roi_cls_loc = 0.1 * jax.random.normal(ks[4], (n_sample, n_class * 4), jnp.float32)
    roi_score = jax.random.normal(ks[5], (n_sample, n_class), jnp.float32)
    gt_roi_loc = 0.1 * jax.random.normal(ks[6], (n_sample, 4), jnp.float32)
    gt_roi_label = jax.random.randint(ks[7], (n_sample,), 0, n_class, jnp.int32)
    gt_roi_score = jax.random.uniform(ks[8], (n_sample,), jnp.float32)

    st_stage4 = jax.random.normal(ks[9], (1, 8, 16, 16), jnp.float32)
    teacher_stage4 = jax.random.normal(ks[10], (1, 8, 16, 16), jnp.float32)
    st_stage5 = jax.random.normal(ks[11], (1, 8, 8, 8), jnp.float32)
    teacher_stage5 = jax.random.normal(ks[12], (1, 8, 8, 8), jnp.float32)

    args = (rpn_loc, rpn_score, gt_rpn_loc, gt_rpn_label, roi_cls_loc, roi_score,
            gt_roi_loc, gt_roi_label, gt_roi_score, st_stage4, teacher_stage4,
            st_stage5, teacher_stage5)

    losses = jax.jit(faster_rcnn_trainer_forward)(*args)
    losses = jax.block_until_ready(losses)

    ref = _ref_forward(*args)
    # only remaining approx op is the EUP reciprocal on the max-softmax path
    np.testing.assert_allclose(np.array(losses), np.array(ref), rtol=2e-3, atol=2e-3)

    print("KERNEL_OK")
</pallas_src>

<mosaic_0001>
module attributes {stable_mosaic.version = 11 : i64} {
  func.func @_fused_loss_kernel(%arg0: i32, %arg1: memref<32x256xf32, #tpu.memory_space<vmem>>, %arg2: memref<136x128xf32, #tpu.memory_space<vmem>>, %arg3: memref<2x16x128xf32, #tpu.memory_space<vmem>>, %arg4: memref<2x8x128xf32, #tpu.memory_space<vmem>>, %arg5: memref<1x128xf32, #tpu.memory_space<vmem>>, %arg6: memref<1x1xf32, #tpu.memory_space<vmem>>, %arg7: memref<1x1xf32, #tpu.memory_space<vmem>>) attributes {dimension_semantics = [#tpu.dimension_semantics<arbitrary>], iteration_bounds = array<i64: 1>, scalar_prefetch = 0 : i64, scratch_operands = 2 : i64, tpu.core_type = #tpu.core_type<tc>, window_params = [{pipeline_mode = #tpu.pipeline_mode<synchronous>, transform_indices = @transform_0, window_bounds = array<i64: 32, 256>}, {pipeline_mode = #tpu.pipeline_mode<synchronous>, transform_indices = @transform_1, window_bounds = array<i64: 136, 128>}, {transform_indices = @transform_2, window_bounds = array<i64: 2, 16, 128>}, {transform_indices = @transform_3, window_bounds = array<i64: 2, 8, 128>}, {pipeline_mode = #tpu.pipeline_mode<synchronous>, transform_indices = @transform_4, window_bounds = array<i64: 1, 128>}]} {
    %c0_i32 = arith.constant 0 : i32
    %0 = arith.cmpi eq, %arg0, %c0_i32 : i32
    %1 = arith.extui %0 : i1 to i32
    %c0_i32_0 = arith.constant 0 : i32
    %2 = arith.cmpi ne, %1, %c0_i32_0 : i32
    scf.if %2 {
      %cst_22 = arith.constant 0.000000e+00 : f32
      %32 = vector.broadcast %cst_22 : f32 to vector<1x1xf32>
      %c0_23 = arith.constant 0 : index
      %c0_24 = arith.constant 0 : index
      %33 = vector.load %arg6[%c0_23, %c0_24] : memref<1x1xf32, #tpu.memory_space<vmem>>, vector<1x1xf32>
      tpu.vector_store %arg6[%c0_23, %c0_24], %32 {strides = array<i32>} : memref<1x1xf32, #tpu.memory_space<vmem>>, vector<1x1xf32>,
      %cst_25 = arith.constant 0.000000e+00 : f32
      %34 = vector.broadcast %cst_25 : f32 to vector<1x1xf32>
      %c0_26 = arith.constant 0 : index
      %c0_27 = arith.constant 0 : index
      %35 = vector.load %arg7[%c0_26, %c0_27] : memref<1x1xf32, #tpu.memory_space<vmem>>, vector<1x1xf32>
      tpu.vector_store %arg7[%c0_26, %c0_27], %34 {strides = array<i32>} : memref<1x1xf32, #tpu.memory_space<vmem>>, vector<1x1xf32>,
    } else {
    }
    %c0 = arith.constant 0 : index
    %c0_1 = arith.constant 0 : index
    %3 = vector.load %arg6[%c0, %c0_1] : memref<1x1xf32, #tpu.memory_space<vmem>>, vector<1x1xf32>
    %c0_2 = arith.constant 0 : index
    %c0_3 = arith.constant 0 : index
    %c0_4 = arith.constant 0 : index
    %4 = vector.load %arg3[%c0_2, %c0_3, %c0_4] : memref<2x16x128xf32, #tpu.memory_space<vmem>>, vector<1x16x128xf32>
    %5 = vector.shape_cast %4 : vector<1x16x128xf32> to vector<16x128xf32>
    %c1 = arith.constant 1 : index
    %c0_5 = arith.constant 0 : index
    %c0_6 = arith.constant 0 : index
    %6 = vector.load %arg3[%c1, %c0_5, %c0_6] : memref<2x16x128xf32, #tpu.memory_space<vmem>>, vector<1x16x128xf32>
    %7 = vector.shape_cast %6 : vector<1x16x128xf32> to vector<16x128xf32>
    %8 = arith.subf %5, %7 : vector<16x128xf32>
    %9 = vector.shape_cast %8 : vector<16x128xf32> to vector<1x16x128xf32>
    %cst = arith.constant dense<0.000000e+00> : vector<1xf32>
    %10 = vector.multi_reduction <add>, %9, %cst [1, 2] : vector<1x16x128xf32> to vector<1xf32>
    %11 = vector.shape_cast %10 : vector<1xf32> to vector<1x1x1xf32>
    %12 = vector.extract %11[0, 0, 0] : f32 from vector<1x1x1xf32>
    %13 = vector.broadcast %12 : f32 to vector<1x1xf32>
    %14 = arith.addf %3, %13 : vector<1x1xf32>
    %c0_7 = arith.constant 0 : index
    %c0_8 = arith.constant 0 : index
    %15 = vector.load %arg6[%c0_7, %c0_8] : memref<1x1xf32, #tpu.memory_space<vmem>>, vector<1x1xf32>
    tpu.vector_store %arg6[%c0_7, %c0_8], %14 {strides = array<i32>} : memref<1x1xf32, #tpu.memory_space<vmem>>, vector<1x1xf32>,
    %c0_9 = arith.constant 0 : index
    %c0_10 = arith.constant 0 : index
    %16 = vector.load %arg7[%c0_9, %c0_10] : memref<1x1xf32, #tpu.memory_space<vmem>>, vector<1x1xf32>
    %c0_11 = arith.constant 0 : index
    %c0_12 = arith.constant 0 : index
    %c0_13 = arith.constant 0 : index
    %17 = vector.load %arg4[%c0_11, %c0_12, %c0_13] : memref<2x8x128xf32, #tpu.memory_space<vmem>>, vector<1x8x128xf32>
    %18 = vector.shape_cast %17 : vector<1x8x128xf32> to vector<8x128xf32>
    %c1_14 = arith.constant 1 : index
    %c0_15 = arith.constant 0 : index
    %c0_16 = arith.constant 0 : index
    %19 = vector.load %arg4[%c1_14, %c0_15, %c0_16] : memref<2x8x128xf32, #tpu.memory_space<vmem>>, vector<1x8x128xf32>
    %20 = vector.shape_cast %19 : vector<1x8x128xf32> to vector<8x128xf32>
    %21 = arith.subf %18, %20 : vector<8x128xf32>
    %22 = vector.shape_cast %21 : vector<8x128xf32> to vector<1x8x128xf32>
    %cst_17 = arith.constant dense<0.000000e+00> : vector<1xf32>
    %23 = vector.multi_reduction <add>, %22, %cst_17 [1, 2] : vector<1x8x128xf32> to vector<1xf32>
    %24 = vector.shape_cast %23 : vector<1xf32> to vector<1x1x1xf32>
    %25 = vector.extract %24[0, 0, 0] : f32 from vector<1x1x1xf32>
    %26 = vector.broadcast %25 : f32 to vector<1x1xf32>
    %27 = arith.addf %16, %26 : vector<1x1xf32>
    %c0_18 = arith.constant 0 : index
    %c0_19 = arith.constant 0 : index
    %28 = vector.load %arg7[%c0_18, %c0_19] : memref<1x1xf32, #tpu.memory_space<vmem>>, vector<1x1xf32>
    tpu.vector_store %arg7[%c0_18, %c0_19], %27 {strides = array<i32>} : memref<1x1xf32, #tpu.memory_space<vmem>>, vector<1x1xf32>,
    %c0_i32_20 = arith.constant 0 : i32
    %29 = arith.cmpi eq, %arg0, %c0_i32_20 : i32
    %30 = arith.extui %29 : i1 to i32
    %c0_i32_21 = arith.constant 0 : i32
    %31 = arith.cmpi ne, %30, %c0_i32_21 : i32
    scf.if %31 {
      %c0_22 = arith.constant 0 : index
      %c0_23 = arith.constant 0 : index
      %32 = vector.load %arg1[%c0_22, %c0_23] : memref<32x256xf32, #tpu.memory_space<vmem>>, vector<4x256xf32>
      %c8 = arith.constant 8 : index
      %c0_24 = arith.constant 0 : index
      %33 = vector.load %arg1[%c8, %c0_24] : memref<32x256xf32, #tpu.memory_space<vmem>>, vector<4x256xf32>
      %c16 = arith.constant 16 : index
      %c0_25 = arith.constant 0 : index
      %34 = vector.load %arg1[%c16, %c0_25] : memref<32x256xf32, #tpu.memory_space<vmem>>, vector<1x256xf32>
      %c17 = arith.constant 17 : index
      %c0_26 = arith.constant 0 : index
      %35 = vector.load %arg1[%c17, %c0_26] : memref<32x256xf32, #tpu.memory_space<vmem>>, vector<1x256xf32>
      %c24 = arith.constant 24 : index
      %c0_27 = arith.constant 0 : index
      %36 = vector.load %arg1[%c24, %c0_27] : memref<32x256xf32, #tpu.memory_space<vmem>>, vector<1x256xf32>
      %37 = arith.fptosi %36 : vector<1x256xf32> to vector<1x256xi32>
      %c0_i32_28 = arith.constant 0 : i32
      %38 = vector.broadcast %c0_i32_28 : i32 to vector<1x256xi32>
      %39 = arith.cmpi sgt, %37, %38 : vector<1x256xi32>
      %40 = arith.extui %39 : vector<1x256xi1> to vector<1x256xi32>
      %41 = arith.sitofp %40 : vector<1x256xi32> to vector<1x256xf32>
      %42 = arith.subf %32, %33 : vector<4x256xf32>
      %43 = vector.broadcast %41 : vector<1x256xf32> to vector<4x256xf32>
      %44 = arith.mulf %43, %42 : vector<4x256xf32>
      %c0_i32_29 = arith.constant 0 : i32
      %45 = vector.broadcast %c0_i32_29 : i32 to vector<1x256xi32>
      %46 = arith.cmpi sge, %37, %45 : vector<1x256xi32>
      %47 = arith.extui %46 : vector<1x256xi1> to vector<1x256xi32>
      %48 = arith.sitofp %47 : vector<1x256xi32> to vector<1x256xf32>
      %49 = vector.shape_cast %48 : vector<1x256xf32> to vector<1x1x256xf32>
      %cst_30 = arith.constant dense<0.000000e+00> : vector<1xf32>
      %50 = vector.multi_reduction <add>, %49, %cst_30 [1, 2] : vector<1x1x256xf32> to vector<1xf32>
      %51 = vector.shape_cast %50 : vector<1xf32> to vector<1x1x1xf32>
      %52 = vector.extract %51[0, 0, 0] : f32 from vector<1x1x1xf32>
      %53 = vector.broadcast %52 : f32 to vector<1x1xf32>
      %54 = math.absf %44 : vector<4x256xf32>
      %cst_31 = arith.constant 0.111111112 : f32
      %55 = vector.broadcast %cst_31 : f32 to vector<4x256xf32>
      %56 = arith.cmpf olt, %54, %55 : vector<4x256xf32>
      %cst_32 = arith.constant 4.500000e+00 : f32
      %57 = vector.broadcast %cst_32 : f32 to vector<4x256xf32>
      %58 = arith.mulf %57, %44 : vector<4x256xf32>
      %59 = arith.mulf %58, %44 : vector<4x256xf32>
      %cst_33 = arith.constant 0.055555556 : f32
      %60 = vector.broadcast %cst_33 : f32 to vector<4x256xf32>
      %61 = arith.subf %54, %60 : vector<4x256xf32>
      %62 = arith.select %56, %59, %61 : vector<4x256xi1>, vector<4x256xf32>
      %63 = vector.shape_cast %62 : vector<4x256xf32> to vector<1x4x256xf32>
      %cst_34 = arith.constant dense<0.000000e+00> : vector<1xf32>
      %64 = vector.multi_reduction <add>, %63, %cst_34 [1, 2] : vector<1x4x256xf32> to vector<1xf32>
      %65 = vector.shape_cast %64 : vector<1xf32> to vector<1x1x1xf32>
      %66 = vector.extract %65[0, 0, 0] : f32 from vector<1x1x1xf32>
      %67 = vector.broadcast %66 : f32 to vector<1x1xf32>
      %68 = arith.divf %67, %53 : vector<1x1xf32>
      %69 = arith.maximumf %34, %35 : vector<1x256xf32>
      %70 = arith.subf %34, %69 : vector<1x256xf32>
      %71 = math.exp %70 : vector<1x256xf32>
      %72 = arith.subf %35, %69 : vector<1x256xf32>
      %73 = math.exp %72 : vector<1x256xf32>
      %74 = arith.addf %71, %73 : vector<1x256xf32>
      %75 = math.log %74 : vector<1x256xf32>
      %76 = arith.addf %69, %75 : vector<1x256xf32>
      %c1_i32 = arith.constant 1 : i32
      %77 = vector.broadcast %c1_i32 : i32 to vector<1x256xi32>
      %78 = arith.cmpi eq, %37, %77 : vector<1x256xi32>
      %79 = arith.select %78, %35, %34 : vector<1x256xi1>, vector<1x256xf32>
      %c-1_i32 = arith.constant -1 : i32
      %80 = vector.broadcast %c-1_i32 : i32 to vector<1x256xi32>
      %81 = arith.cmpi ne, %37, %80 : vector<1x256xi32>
      %82 = arith.extui %81 : vector<1x256xi1> to vector<1x256xi32>
      %83 = arith.sitofp %82 : vector<1x256xi32> to vector<1x256xf32>
      %84 = arith.subf %76, %79 : vector<1x256xf32>
      %85 = arith.mulf %84, %83 : vector<1x256xf32>
      %86 = vector.shape_cast %85 : vector<1x256xf32> to vector<1x1x256xf32>
      %cst_35 = arith.constant dense<0.000000e+00> : vector<1xf32>
      %87 = vector.multi_reduction <add>, %86, %cst_35 [1, 2] : vector<1x1x256xf32> to vector<1xf32>
      %88 = vector.shape_cast %87 : vector<1xf32> to vector<1x1x1xf32>
      %89 = vector.extract %88[0, 0, 0] : f32 from vector<1x1x1xf32>
      %90 = vector.broadcast %89 : f32 to vector<1x1xf32>
      %91 = vector.shape_cast %83 : vector<1x256xf32> to vector<1x1x256xf32>
      %cst_36 = arith.constant dense<0.000000e+00> : vector<1xf32>
      %92 = vector.multi_reduction <add>, %91, %cst_36 [1, 2] : vector<1x1x256xf32> to vector<1xf32>
      %93 = vector.shape_cast %92 : vector<1xf32> to vector<1x1x1xf32>
      %94 = vector.extract %93[0, 0, 0] : f32 from vector<1x1x1xf32>
      %95 = vector.broadcast %94 : f32 to vector<1x1xf32>
      %96 = arith.divf %90, %95 : vector<1x1xf32>
      %c0_37 = arith.constant 0 : index
      %c0_38 = arith.constant 0 : index
      %97 = vector.load %arg2[%c0_37, %c0_38] : memref<136x128xf32, #tpu.memory_space<vmem>>, vector<84x128xf32>
      %c88 = arith.constant 88 : index
      %c0_39 = arith.constant 0 : index
      %98 = vector.load %arg2[%c88, %c0_39] : memref<136x128xf32, #tpu.memory_space<vmem>>, vector<4x128xf32>
      %c96 = arith.constant 96 : index
      %c0_40 = arith.constant 0 : index
      %99 = vector.load %arg2[%c96, %c0_40] : memref<136x128xf32, #tpu.memory_space<vmem>>, vector<21x128xf32>
      %c120 = arith.constant 120 : index
      %c0_41 = arith.constant 0 : index
      %100 = vector.load %arg2[%c120, %c0_41] : memref<136x128xf32, #tpu.memory_space<vmem>>, vector<1x128xf32>
      %c128 = arith.constant 128 : index
      %c0_42 = arith.constant 0 : index
      %101 = vector.load %arg2[%c128, %c0_42] : memref<136x128xf32, #tpu.memory_space<vmem>>, vector<1x128xf32>
      %102 = arith.fptosi %101 : vector<1x128xf32> to vector<1x128xi32>
      %c0_i32_43 = arith.constant 0 : i32
      %103 = vector.broadcast %c0_i32_43 : i32 to vector<1x128xi32>
      %104 = arith.cmpi sgt, %102, %103 : vector<1x128xi32>
      %105 = arith.extui %104 : vector<1x128xi1> to vector<1x128xi32>
      %106 = arith.sitofp %105 : vector<1x128xi32> to vector<1x128xf32>
      %c-100_i32 = arith.constant -100 : i32
      %107 = vector.broadcast %c-100_i32 : i32 to vector<1x128xi32>
      %108 = arith.cmpi ne, %102, %107 : vector<1x128xi32>
      %109 = arith.extui %108 : vector<1x128xi1> to vector<1x128xi32>
      %110 = arith.sitofp %109 : vector<1x128xi32> to vector<1x128xf32>
      %c0_i32_44 = arith.constant 0 : i32
      %111 = vector.broadcast %c0_i32_44 : i32 to vector<1x128xi32>
      %112 = arith.cmpi sge, %102, %111 : vector<1x128xi32>
      %113 = arith.extui %112 : vector<1x128xi1> to vector<1x128xi32>
      %114 = arith.sitofp %113 : vector<1x128xi32> to vector<1x128xf32>
      %115 = vector.shape_cast %114 : vector<1x128xf32> to vector<1x1x128xf32>
      %cst_45 = arith.constant dense<0.000000e+00> : vector<1xf32>
      %116 = vector.multi_reduction <add>, %115, %cst_45 [1, 2] : vector<1x1x128xf32> to vector<1xf32>
      %117 = vector.shape_cast %116 : vector<1xf32> to vector<1x1x1xf32>
      %118 = vector.extract %117[0, 0, 0] : f32 from vector<1x1x1xf32>
      %119 = vector.broadcast %118 : f32 to vector<1x1xf32>
      %120 = tpu.iota {dimensions = array<i32: 0>} : vector<84x128xi32>
      %c4_i32 = arith.constant 4 : i32
      %121 = vector.broadcast %c4_i32 : i32 to vector<1x128xi32>
      %122 = arith.muli %102, %121 : vector<1x128xi32>
      %123 = vector.broadcast %122 : vector<1x128xi32> to vector<84x128xi32>
      %124 = arith.cmpi sge, %120, %123 : vector<84x128xi32>
      %c4_i32_46 = arith.constant 4 : i32
      %125 = vector.broadcast %c4_i32_46 : i32 to vector<1x128xi32>
      %126 = arith.addi %122, %125 : vector<1x128xi32>
      %127 = vector.broadcast %126 : vector<1x128xi32> to vector<84x128xi32>
      %128 = arith.cmpi slt, %120, %127 : vector<84x128xi32>
      %129 = arith.andi %124, %128 : vector<84x128xi1>
      %130 = arith.extui %129 : vector<84x128xi1> to vector<84x128xi32>
      %131 = arith.sitofp %130 : vector<84x128xi32> to vector<84x128xf32>
      %c3_i32 = arith.constant 3 : i32
      %132 = vector.broadcast %c3_i32 : i32 to vector<84x128xi32>
      %133 = arith.andi %120, %132 : vector<84x128xi32>
      %c0_i32_47 = arith.constant 0 : i32
      %134 = vector.broadcast %c0_i32_47 : i32 to vector<84x128xi32>
      %135 = arith.cmpi eq, %133, %134 : vector<84x128xi32>
      %136 = vector.extract_strided_slice %98 {offsets = [0, 0], sizes = [1, 128], strides = [1, 1]} : vector<4x128xf32> to vector<1x128xf32>
      %c1_i32_48 = arith.constant 1 : i32
      %137 = vector.broadcast %c1_i32_48 : i32 to vector<84x128xi32>
      %138 = arith.cmpi eq, %133, %137 : vector<84x128xi32>
      %139 = vector.extract_strided_slice %98 {offsets = [1, 0], sizes = [1, 128], strides = [1, 1]} : vector<4x128xf32> to vector<1x128xf32>
      %c2_i32 = arith.constant 2 : i32
      %140 = vector.broadcast %c2_i32 : i32 to vector<84x128xi32>
      %141 = arith.cmpi eq, %133, %140 : vector<84x128xi32>
      %142 = vector.extract_strided_slice %98 {offsets = [2, 0], sizes = [1, 128], strides = [1, 1]} : vector<4x128xf32> to vector<1x128xf32>
      %143 = vector.extract_strided_slice %98 {offsets = [3, 0], sizes = [1, 128], strides = [1, 1]} : vector<4x128xf32> to vector<1x128xf32>
      %144 = vector.shape_cast %142 : vector<1x128xf32> to vector<1x128xf32>
      %145 = vector.broadcast %144 : vector<1x128xf32> to vector<84x128xf32>
      %146 = vector.shape_cast %143 : vector<1x128xf32> to vector<1x128xf32>
      %147 = vector.broadcast %146 : vector<1x128xf32> to vector<84x128xf32>
      %148 = arith.select %141, %145, %147 : vector<84x128xi1>, vector<84x128xf32>
      %149 = vector.shape_cast %139 : vector<1x128xf32> to vector<1x128xf32>
      %150 = vector.broadcast %149 : vector<1x128xf32> to vector<84x128xf32>
      %151 = arith.select %138, %150, %148 : vector<84x128xi1>, vector<84x128xf32>
      %152 = vector.shape_cast %136 : vector<1x128xf32> to vector<1x128xf32>
      %153 = vector.broadcast %152 : vector<1x128xf32> to vector<84x128xf32>
      %154 = arith.select %135, %153, %151 : vector<84x128xi1>, vector<84x128xf32>
      %155 = vector.broadcast %106 : vector<1x128xf32> to vector<84x128xf32>
      %156 = arith.mulf %131, %155 : vector<84x128xf32>
      %157 = arith.subf %97, %154 : vector<84x128xf32>
      %158 = arith.mulf %156, %157 : vector<84x128xf32>
      %159 = math.absf %158 : vector<84x128xf32>
      %cst_49 = arith.constant 1.000000e+00 : f32
      %160 = vector.broadcast %cst_49 : f32 to vector<84x128xf32>
      %161 = arith.cmpf olt, %159, %160 : vector<84x128xf32>
      %cst_50 = arith.constant 5.000000e-01 : f32
      %162 = vector.broadcast %cst_50 : f32 to vector<84x128xf32>
      %163 = arith.mulf %162, %158 : vector<84x128xf32>
      %164 = arith.mulf %163, %158 : vector<84x128xf32>
      %cst_51 = arith.constant 5.000000e-01 : f32
      %165 = vector.broadcast %cst_51 : f32 to vector<84x128xf32>
      %166 = arith.subf %159, %165 : vector<84x128xf32>
      %167 = arith.select %161, %164, %166 : vector<84x128xi1>, vector<84x128xf32>
      %168 = vector.shape_cast %167 : vector<84x128xf32> to vector<1x84x128xf32>
      %cst_52 = arith.constant dense<0.000000e+00> : vector<1xf32>
      %169 = vector.multi_reduction <add>, %168, %cst_52 [1, 2] : vector<1x84x128xf32> to vector<1xf32>
      %170 = vector.shape_cast %169 : vector<1xf32> to vector<1x1x1xf32>
      %171 = vector.extract %170[0, 0, 0] : f32 from vector<1x1x1xf32>
      %172 = vector.broadcast %171 : f32 to vector<1x1xf32>
      %173 = arith.divf %172, %119 : vector<1x1xf32>
      %cst_53 = arith.constant dense<0xFF800000> : vector<128xf32>
      %174 = vector.multi_reduction <maximumf>, %99, %cst_53 [0] : vector<21x128xf32> to vector<128xf32>
      %175 = vector.shape_cast %174 : vector<128xf32> to vector<1x128xf32>
      %176 = vector.broadcast %175 : vector<1x128xf32> to vector<21x128xf32>
      %177 = arith.subf %99, %176 : vector<21x128xf32>
      %178 = math.exp %177 : vector<21x128xf32>
      %cst_54 = arith.constant dense<0.000000e+00> : vector<128xf32>
      %179 = vector.multi_reduction <add>, %178, %cst_54 [0] : vector<21x128xf32> to vector<128xf32>
      %180 = vector.shape_cast %179 : vector<128xf32> to vector<1x128xf32>
      %181 = math.log %180 : vector<1x128xf32>
      %182 = arith.addf %175, %181 : vector<1x128xf32>
      %183 = tpu.iota {dimensions = array<i32: 0>} : vector<21x128xi32>
      %c-100_i32_55 = arith.constant -100 : i32
      %184 = vector.broadcast %c-100_i32_55 : i32 to vector<1x128xi32>
      %185 = arith.cmpi eq, %102, %184 : vector<1x128xi32>
      %c0_i32_56 = arith.constant 0 : i32
      %186 = vector.broadcast %c0_i32_56 : i32 to vector<1x128xi32>
      %187 = arith.select %185, %186, %102 : vector<1x128xi1>, vector<1x128xi32>
      %188 = vector.broadcast %187 : vector<1x128xi32> to vector<21x128xi32>
      %189 = arith.cmpi eq, %183, %188 : vector<21x128xi32>
      %190 = arith.extui %189 : vector<21x128xi1> to vector<21x128xi32>
      %191 = arith.sitofp %190 : vector<21x128xi32> to vector<21x128xf32>
      %192 = arith.mulf %191, %99 : vector<21x128xf32>
      %cst_57 = arith.constant dense<0.000000e+00> : vector<128xf32>
      %193 = vector.multi_reduction <add>, %192, %cst_57 [0] : vector<21x128xf32> to vector<128xf32>
      %194 = vector.shape_cast %193 : vector<128xf32> to vector<1x128xf32>
      %195 = arith.subf %182, %194 : vector<1x128xf32>
      %196 = arith.mulf %195, %110 : vector<1x128xf32>
      %197 = vector.shape_cast %196 : vector<1x128xf32> to vector<1x1x128xf32>
      %cst_58 = arith.constant dense<0.000000e+00> : vector<1xf32>
      %198 = vector.multi_reduction <add>, %197, %cst_58 [1, 2] : vector<1x1x128xf32> to vector<1xf32>
      %199 = vector.shape_cast %198 : vector<1xf32> to vector<1x1x1xf32>
      %200 = vector.extract %199[0, 0, 0] : f32 from vector<1x1x1xf32>
      %201 = vector.broadcast %200 : f32 to vector<1x1xf32>
      %202 = vector.shape_cast %110 : vector<1x128xf32> to vector<1x1x128xf32>
      %cst_59 = arith.constant dense<0.000000e+00> : vector<1xf32>
      %203 = vector.multi_reduction <add>, %202, %cst_59 [1, 2] : vector<1x1x128xf32> to vector<1xf32>
      %204 = vector.shape_cast %203 : vector<1xf32> to vector<1x1x1xf32>
      %205 = vector.extract %204[0, 0, 0] : f32 from vector<1x1x1xf32>
      %206 = vector.broadcast %205 : f32 to vector<1x1xf32>
      %207 = arith.divf %201, %206 : vector<1x1xf32>
      %208 = tpu.reciprocal %180 {approx = true} : vector<1x128xf32> -> vector<1x128xf32>
      %209 = arith.subf %208, %100 : vector<1x128xf32>
      %210 = math.absf %209 : vector<1x128xf32>
      %211 = arith.mulf %210, %110 : vector<1x128xf32>
      %212 = vector.shape_cast %211 : vector<1x128xf32> to vector<1x1x128xf32>
      %cst_60 = arith.constant dense<0.000000e+00> : vector<1xf32>
      %213 = vector.multi_reduction <add>, %212, %cst_60 [1, 2] : vector<1x1x128xf32> to vector<1xf32>
      %214 = vector.shape_cast %213 : vector<1xf32> to vector<1x1x1xf32>
      %215 = vector.extract %214[0, 0, 0] : f32 from vector<1x1x1xf32>
      %216 = vector.broadcast %215 : f32 to vector<1x1xf32>
      %cst_61 = arith.constant 1.280000e+02 : f32
      %217 = vector.broadcast %cst_61 : f32 to vector<1x1xf32>
      %218 = arith.divf %216, %217 : vector<1x1xf32>
      %c0_62 = arith.constant 0 : index
      %c0_63 = arith.constant 0 : index
      %219 = vector.load %arg6[%c0_62, %c0_63] : memref<1x1xf32, #tpu.memory_space<vmem>>, vector<1x1xf32>
      %cst_64 = arith.constant 2.048000e+03 : f32
      %220 = vector.broadcast %cst_64 : f32 to vector<1x1xf32>
      %221 = arith.divf %219, %220 : vector<1x1xf32>
      %c0_65 = arith.constant 0 : index
      %c0_66 = arith.constant 0 : index
      %222 = vector.load %arg7[%c0_65, %c0_66] : memref<1x1xf32, #tpu.memory_space<vmem>>, vector<1x1xf32>
      %cst_67 = arith.constant 5.120000e+02 : f32
      %223 = vector.broadcast %cst_67 : f32 to vector<1x1xf32>
      %224 = arith.divf %222, %223 : vector<1x1xf32>
      %225 = arith.mulf %221, %221 : vector<1x1xf32>
      %cst_68 = arith.constant 2.048000e+03 : f32
      %226 = vector.broadcast %cst_68 : f32 to vector<1x1xf32>
      %227 = arith.divf %225, %226 : vector<1x1xf32>
      %228 = arith.mulf %224, %224 : vector<1x1xf32>
      %cst_69 = arith.constant 5.120000e+02 : f32
      %229 = vector.broadcast %cst_69 : f32 to vector<1x1xf32>
      %230 = arith.divf %228, %229 : vector<1x1xf32>
      %231 = arith.addf %227, %230 : vector<1x1xf32>
      %232 = arith.addf %68, %96 : vector<1x1xf32>
      %233 = arith.addf %232, %173 : vector<1x1xf32>
      %234 = arith.addf %233, %207 : vector<1x1xf32>
      %235 = arith.addf %234, %231 : vector<1x1xf32>
      %236 = arith.addf %235, %218 : vector<1x1xf32>
      %237 = tpu.iota {dimensions = array<i32: 1>} : vector<1x128xi32>
      %cst_70 = arith.constant 0.000000e+00 : f32
      %238 = vector.broadcast %cst_70 : f32 to vector<1x128xf32>
      %c0_i32_71 = arith.constant 0 : i32
      %239 = vector.broadcast %c0_i32_71 : i32 to vector<1x128xi32>
      %240 = arith.cmpi eq, %237, %239 : vector<1x128xi32>
      %241 = vector.shape_cast %68 : vector<1x1xf32> to vector<1x1xf32>
      %242 = vector.broadcast %241 : vector<1x1xf32> to vector<1x128xf32>
      %243 = arith.select %240, %242, %238 : vector<1x128xi1>, vector<1x128xf32>
      %c1_i32_72 = arith.constant 1 : i32
      %244 = vector.broadcast %c1_i32_72 : i32 to vector<1x128xi32>
      %245 = arith.cmpi eq, %237, %244 : vector<1x128xi32>
      %246 = vector.shape_cast %96 : vector<1x1xf32> to vector<1x1xf32>
      %247 = vector.broadcast %246 : vector<1x1xf32> to vector<1x128xf32>
      %248 = arith.select %245, %247, %243 : vector<1x128xi1>, vector<1x128xf32>
      %c2_i32_73 = arith.constant 2 : i32
      %249 = vector.broadcast %c2_i32_73 : i32 to vector<1x128xi32>
      %250 = arith.cmpi eq, %237, %249 : vector<1x128xi32>
      %251 = vector.shape_cast %173 : vector<1x1xf32> to vector<1x1xf32>
      %252 = vector.broadcast %251 : vector<1x1xf32> to vector<1x128xf32>
      %253 = arith.select %250, %252, %248 : vector<1x128xi1>, vector<1x128xf32>
      %c3_i32_74 = arith.constant 3 : i32
      %254 = vector.broadcast %c3_i32_74 : i32 to vector<1x128xi32>
      %255 = arith.cmpi eq, %237, %254 : vector<1x128xi32>
      %256 = vector.shape_cast %207 : vector<1x1xf32> to vector<1x1xf32>
      %257 = vector.broadcast %256 : vector<1x1xf32> to vector<1x128xf32>
      %258 = arith.select %255, %257, %253 : vector<1x128xi1>, vector<1x128xf32>
      %c4_i32_75 = arith.constant 4 : i32
      %259 = vector.broadcast %c4_i32_75 : i32 to vector<1x128xi32>
      %260 = arith.cmpi eq, %237, %259 : vector<1x128xi32>
      %261 = vector.shape_cast %231 : vector<1x1xf32> to vector<1x1xf32>
      %262 = vector.broadcast %261 : vector<1x1xf32> to vector<1x128xf32>
      %263 = arith.select %260, %262, %258 : vector<1x128xi1>, vector<1x128xf32>
      %c5_i32 = arith.constant 5 : i32
      %264 = vector.broadcast %c5_i32 : i32 to vector<1x128xi32>
      %265 = arith.cmpi eq, %237, %264 : vector<1x128xi32>
      %266 = vector.shape_cast %218 : vector<1x1xf32> to vector<1x1xf32>
      %267 = vector.broadcast %266 : vector<1x1xf32> to vector<1x128xf32>
      %268 = arith.select %265, %267, %263 : vector<1x128xi1>, vector<1x128xf32>
      %c6_i32 = arith.constant 6 : i32
      %269 = vector.broadcast %c6_i32 : i32 to vector<1x128xi32>
      %270 = arith.cmpi eq, %237, %269 : vector<1x128xi32>
      %271 = vector.shape_cast %236 : vector<1x1xf32> to vector<1x1xf32>
      %272 = vector.broadcast %271 : vector<1x1xf32> to vector<1x128xf32>
      %273 = arith.select %270, %272, %268 : vector<1x128xi1>, vector<1x128xf32>
      %c0_76 = arith.constant 0 : index
      %c0_77 = arith.constant 0 : index
      %274 = vector.load %arg5[%c0_76, %c0_77] : memref<1x128xf32, #tpu.memory_space<vmem>>, vector<1x128xf32>
      tpu.vector_store %arg5[%c0_76, %c0_77], %273 {strides = array<i32>} : memref<1x128xf32, #tpu.memory_space<vmem>>, vector<1x128xf32>,
    } else {
    }
    return
  }
  func.func @transform_0(%arg0: i32) -> (i32, i32) {
    %c0_i32 = arith.constant 0 : i32
    %c0_i32_0 = arith.constant 0 : i32
    %c0_i32_1 = arith.constant 0 : i32
    return %c0_i32, %c0_i32_0 : i32, i32
  }
  func.func @transform_1(%arg0: i32) -> (i32, i32) {
    %c0_i32 = arith.constant 0 : i32
    %c0_i32_0 = arith.constant 0 : i32
    %c0_i32_1 = arith.constant 0 : i32
    return %c0_i32, %c0_i32_0 : i32, i32
  }
  func.func @transform_2(%arg0: i32) -> (i32, i32, i32) {
    %c0_i32 = arith.constant 0 : i32
    %c0_i32_0 = arith.constant 0 : i32
    %c0_i32_1 = arith.constant 0 : i32
    return %c0_i32, %arg0, %c0_i32_0 : i32, i32, i32
  }
  func.func @transform_3(%arg0: i32) -> (i32, i32, i32) {
    %c0_i32 = arith.constant 0 : i32
    %c0_i32_0 = arith.constant 0 : i32
    %c0_i32_1 = arith.constant 0 : i32
    return %c0_i32, %arg0, %c0_i32_0 : i32, i32, i32
  }
  func.func @transform_4(%arg0: i32) -> (i32, i32) {
    %c0_i32 = arith.constant 0 : i32
    %c0_i32_0 = arith.constant 0 : i32
    %c0_i32_1 = arith.constant 0 : i32
    return %c0_i32, %c0_i32_0 : i32, i32
  }
}

</mosaic_0001>

<llo_original>
// kernel: faster_rcnn_trainer_forward.1
$region0: #{faster_rcnn_trainer_forward.1}
  #allocation0 [shape = 'u32[]', space=smem, size = 0x4, offset = 0x4, fixed_abs, tag = 'smem constant byte address 0x4 - core index']
  #allocation1 [shape = 'u32[144,128]{1,0:T(1,128)}', space=vmem, size = 0x12000, scoped, tag = 'internal scratch']
  #allocation2 [shape = 'f32[1,1]{1,0:T(1,128)}', space=vmem, size = 0x200, scoped, tag = 'scratch operand']
  #allocation3 [shape = 'f32[1,1]{1,0:T(1,128)}', space=vmem, size = 0x200, scoped, tag = 'scratch operand']
  %s0 = inlined_call_operand.vmem [shape: f32[32,256], index: 0, kind: input, shape index: {}]
  %s1 = inlined_call_operand.vmem [shape: f32[136,128], index: 1, kind: input, shape index: {}]
  %s2 = inlined_call_operand.vmem [shape: f32[2,16,128], index: 2, kind: input, shape index: {}]
  %s3 = inlined_call_operand.vmem [shape: f32[2,8,128], index: 3, kind: input, shape index: {}]
  %s4 = inlined_call_operand.vmem [shape: f32[1,128], index: 4, kind: output, shape index: {}]
  %s5 = sld [smem:[#allocation0]]
  $region34: #{faster_rcnn_trainer_forward.1} parent=0
    _
  %s7 = ssub.s32 1, %s5
  %s8 = scalar_select 0, %s7, %s5
  // Predicated region
  $region2: #{faster_rcnn_trainer_forward.1} parent=0 // pred_check
    _
  $region3: #{faster_rcnn_trainer_forward.1} parent=0 // pred_check_branch
    %10 = sbr.rel (0) target = $region5
  $region4: #{faster_rcnn_trainer_forward.1} parent=0 // pred_region
    _
  $region5: #{faster_rcnn_trainer_forward.1} parent=0 // pred_fallthru
    _
  // Predicated region
  $region6: #{faster_rcnn_trainer_forward.1} parent=0 // pred_check
    _
  $region7: #{faster_rcnn_trainer_forward.1} parent=0 // pred_check_branch
    %12 = sbr.rel (0) target = $region9
  $region8: #{faster_rcnn_trainer_forward.1} parent=0 // pred_region
    _
  $region9: #{faster_rcnn_trainer_forward.1} parent=0 // pred_fallthru
    _
  // Predicated region
  $region10: #{faster_rcnn_trainer_forward.1} parent=0 // pred_check
    _
  $region11: #{faster_rcnn_trainer_forward.1} parent=0 // pred_check_branch
    %14 = sbr.rel (0) target = $region13
  $region12: #{faster_rcnn_trainer_forward.1} parent=0 // pred_region
    _
  $region13: #{faster_rcnn_trainer_forward.1} parent=0 // pred_fallthru
    _
  // Predicated region
  $region14: #{faster_rcnn_trainer_forward.1} parent=0 // pred_check
    _
  $region15: #{faster_rcnn_trainer_forward.1} parent=0 // pred_check_branch
    %16 = sbr.rel (0) target = $region17
  $region16: #{faster_rcnn_trainer_forward.1} parent=0 // pred_region
    _
  $region17: #{faster_rcnn_trainer_forward.1} parent=0 // pred_fallthru
    _
  %p17 = scmp.eq.s32.totalorder 0, 0
  // Predicated region
  $region18: #{faster_rcnn_trainer_forward.1} parent=0 // pred_check
    %p18 = pneg %p17
  $region19: #{faster_rcnn_trainer_forward.1} parent=0 // pred_check_branch
    %20 = sbr.rel (%p18) target = $region21
  $region20: #{faster_rcnn_trainer_forward.1} parent=0 // pred_region
    %vm21 = vcmask 0
    %22 = vst.msk [vmem:[#allocation2] sm:$0x1] %vm21, 0.0
    %23 = vst.msk [vmem:[#allocation3] sm:$0x1] %vm21, 0.0
  $region21: #{faster_rcnn_trainer_forward.1} parent=0 // pred_fallthru
    _
  %v24 = vld [vmem:[#allocation2] sm:$0x1]
  %v25 = vld [vmem:[%s2] sm:$0xff]
  %v26 = vld [vmem:[%s2 + $0x8] sm:$0xff]
  %s27 = scalar_lea.vmem %s2, 16
  %v28 = vld [vmem:[%s27] sm:$0xff]
  %v29 = vld [vmem:[%s27 + $0x8] sm:$0xff]
  %v30 = vsub.f32 %v25, %v28
  %v31 = vsub.f32 %v26, %v29
  %v32 = vadd.f32 %v30, %v31
  %33 = vadd.xlane.f32.xlu0 %v32
  %v34 = vpop.xlane.xlu0 %33
  %v35 = vrot.slane %v34, 4
  %v36 = vadd.f32 %v34, %v35
  %v37 = vrot.slane %v36, 2
  %v38 = vadd.f32 %v36, %v37
  %v39 = vrot.slane %v38, 1
  %v40 = vadd.f32 %v38, %v39
  %s41 = vtos %v40
  %v42 = vstv %s41
  %v43 = vadd.f32 %v24, %v42
  %vm44 = vcmask 0
  %45 = vst.msk [vmem:[#allocation2] sm:$0x1] %vm44, %v43
  %v46 = vld [vmem:[#allocation3] sm:$0x1]
  %v47 = vld [vmem:[%s3] sm:$0xff]
  %s48 = scalar_lea.vmem %s3, 8
  %v49 = vld [vmem:[%s48] sm:$0xff]
  %v50 = vsub.f32 %v47, %v49
  %51 = vadd.xlane.f32.xlu0 %v50
  %v52 = vpop.xlane.xlu0 %51
  %v53 = vrot.slane %v52, 4
  %v54 = vadd.f32 %v52, %v53
  %v55 = vrot.slane %v54, 2
  %v56 = vadd.f32 %v54, %v55
  %v57 = vrot.slane %v56, 1
  %v58 = vadd.f32 %v56, %v57
  %s59 = vtos %v58
  %v60 = vstv %s59
  %v61 = vadd.f32 %v46, %v60
  %62 = vst.msk [vmem:[#allocation3] sm:$0x1] %vm44, %v61
  // Predicated region
  $region22: #{faster_rcnn_trainer_forward.1} parent=0 // pred_check
    %p63 = pneg %p17
  $region23: #{faster_rcnn_trainer_forward.1} parent=0 // pred_check_branch
    %65 = sbr.rel (%p63) target = $region25
  $region24: #{faster_rcnn_trainer_forward.1} parent=0 // pred_region
    %v66 = vld [vmem:[%s0] sm:$0xf]
    %v67 = vld [vmem:[%s0 + $0x8] sm:$0xf]
    %v68 = vld [vmem:[%s0 + $0x10] sm:$0xf]
    %v69 = vld [vmem:[%s0 + $0x18] sm:$0xf]
    %s70 = scalar_lea.vmem %s0, 32
    %v71 = vld [vmem:[%s70] ss:$8 sm:$0x3]
    %s72 = scalar_lea.vmem %s0, 33
    %v73 = vld [vmem:[%s72] ss:$8 sm:$0x3]
    %s74 = scalar_lea.vmem %s0, 48
    %v75 = vld [vmem:[%s74] ss:$8 sm:$0x3]
    %v76 = vcvt.f32.s32.to.zero.pseudo %v75
    %vm77 = vcmp.gt.s32.totalorder %v76, 0
    %v78 = vsel %vm77, 1, 0
    %v79 = vcvt.s32.f32 %v78
    %v80 = vsub.f32 %v66, %v68
    %v81 = vsub.f32 %v67, %v69
    %v83 = vlaneseq
    %v84 = vshrl.u32 %v83, 7
    %v85 = vsub.s32 0, %v84
    %v86 = vrot.slane %v79, %v85
    %v87 = vlaneseq
    %v88 = vshrl.u32 %v87, 7
    %v89 = vsub.s32 1, %v88
    %v90 = vrot.slane %v79, %v89
    %v93 = vmul.f32 %v86, %v80
    %v94 = vmul.f32 %v90, %v81
    %vm95 = vcmp.ge.s32.totalorder %v76, 0
    %v96 = vsel %vm95, 1, 0
    %v97 = vcvt.s32.f32 %v96
    %v99 = vlaneseq
    %v100 = vshrl.u32 %v99, 7
    %v101 = vsub.s32 0, %v100
    %v102 = vrot.slane %v97, %v101
    %v103 = vlaneseq
    %v104 = vshrl.u32 %v103, 7
    %v105 = vsub.s32 1, %v104
    %v106 = vrot.slane %v97, %v105
    %vm109 = vcmask 1040384
    %v110 = vsel %vm109, %v102, 0.0
    %v111 = vsel %vm109, %v106, 0.0
    %v112 = vadd.f32 %v110, %v111
    %113 = vadd.xlane.f32.xlu0 %v112
    %v114 = vpop.xlane.xlu0 %113
    %v115 = vrot.slane %v114, 4
    %v116 = vadd.f32 %v114, %v115
    %v117 = vrot.slane %v116, 2
    %v118 = vadd.f32 %v116, %v117
    %v119 = vrot.slane %v118, 1
    %v120 = vadd.f32 %v118, %v119
    %s121 = vtos %v120
    %v122 = vstv %s121
    %v123 = vand.u32 2147483647, %v93
    %v124 = vand.u32 2147483647, %v94
    %vm125 = vcmp.lt.f32.partialorder %v123, 0.11111111
    %vm126 = vcmp.lt.f32.partialorder %v124, 0.11111111
    %v127 = vmul.f32 %v93, 4.5
    %v128 = vmul.f32 %v94, 4.5
    %v129 = vmul.f32 %v127, %v93
    %v130 = vmul.f32 %v128, %v94
    %v131 = vsub.f32 %v123, 0.055555556
    %v132 = vsub.f32 %v124, 0.055555556
    %v133 = vsel %vm125, %v129, %v131
    %v134 = vsel %vm126, %v130, %v132
    %vm135 = vcmask 1043456
    %v136 = vsel %vm135, %v133, 0.0
    %v137 = vsel %vm135, %v134, 0.0
    %v138 = vadd.f32 %v136, %v137
    %139 = vadd.xlane.f32.xlu0 %v138
    %v140 = vpop.xlane.xlu0 %139
    %v141 = vrot.slane %v140, 4
    %v142 = vadd.f32 %v140, %v141
    %v143 = vrot.slane %v142, 2
    %v144 = vadd.f32 %v142, %v143
    %v145 = vrot.slane %v144, 1
    %v146 = vadd.f32 %v144, %v145
    %s147 = vtos %v146
    %v148 = vstv %s147
    %v149 = vrcp.pop %v122
    %v150 = vmul.f32 %v148, %v149
    %v151 = vmax.f32 %v71, %v73
    %v152 = vsub.f32 %v71, %v151
    %v153 = vmul.f32 %v152, 1.442695
    %v154 = vpow.pop %v153
    %v155 = vsub.f32 %v73, %v151
    %v156 = vmul.f32 %v155, 1.442695
    %v157 = vpow.pop %v156
    %v158 = vadd.f32 %v154, %v157
    %v159 = vlog2.pop %v158
    %v160 = vmul.f32 %v159, 0.6931472
    %v161 = vadd.f32 %v151, %v160
    %vm162 = vcmp.eq.s32.totalorder %v76, 1
    %v163 = vsel %vm162, %v73, %v71
    %vm164 = vcmp.ne.s32.totalorder %v76, 4294967295
    %v165 = vsel %vm164, 1, 0
    %v166 = vcvt.s32.f32 %v165
    %v167 = vsub.f32 %v161, %v163
    %v168 = vmul.f32 %v167, %v166
    %v170 = vlaneseq
    %v171 = vshrl.u32 %v170, 7
    %v172 = vsub.s32 0, %v171
    %v173 = vrot.slane %v168, %v172
    %v174 = vlaneseq
    %v175 = vshrl.u32 %v174, 7
    %v176 = vsub.s32 1, %v175
    %v177 = vrot.slane %v168, %v176
    %v180 = vsel %vm109, %v173, 0.0
    %v181 = vsel %vm109, %v177, 0.0
    %v182 = vadd.f32 %v180, %v181
    %183 = vadd.xlane.f32.xlu0 %v182
    %v184 = vpop.xlane.xlu0 %183
    %v185 = vrot.slane %v184, 4
    %v186 = vadd.f32 %v184, %v185
    %v187 = vrot.slane %v186, 2
    %v188 = vadd.f32 %v186, %v187
    %v189 = vrot.slane %v188, 1
    %v190 = vadd.f32 %v188, %v189
    %s191 = vtos %v190
    %v192 = vstv %s191
    %v194 = vlaneseq
    %v195 = vshrl.u32 %v194, 7
    %v196 = vsub.s32 0, %v195
    %v197 = vrot.slane %v166, %v196
    %v198 = vlaneseq
    %v199 = vshrl.u32 %v198, 7
    %v200 = vsub.s32 1, %v199
    %v201 = vrot.slane %v166, %v200
    %v204 = vsel %vm109, %v197, 0.0
    %v205 = vsel %vm109, %v201, 0.0
    %v206 = vadd.f32 %v204, %v205
    %207 = vadd.xlane.f32.xlu0 %v206
    %v208 = vpop.xlane.xlu0 %207
    %v209 = vrot.slane %v208, 4
    %v210 = vadd.f32 %v208, %v209
    %v211 = vrot.slane %v210, 2
    %v212 = vadd.f32 %v210, %v211
    %v213 = vrot.slane %v212, 1
    %v214 = vadd.f32 %v212, %v213
    %s215 = vtos %v214
    %v216 = vstv %s215
    %v217 = vrcp.pop %v216
    %v218 = vmul.f32 %v192, %v217
    %v219 = vld [vmem:[%s1] sm:$0xff]
    %v220 = vld [vmem:[%s1 + $0x8] sm:$0xff]
    %v221 = vld [vmem:[%s1 + $0x10] sm:$0xff]
    %v222 = vld [vmem:[%s1 + $0x18] sm:$0xff]
    %v223 = vld [vmem:[%s1 + $0x20] sm:$0xff]
    %v224 = vld [vmem:[%s1 + $0x28] sm:$0xff]
    %v225 = vld [vmem:[%s1 + $0x30] sm:$0xff]
    %v226 = vld [vmem:[%s1 + $0x38] sm:$0xff]
    %v227 = vld [vmem:[%s1 + $0x40] sm:$0xff]
    %v228 = vld [vmem:[%s1 + $0x48] sm:$0xff]
    %v229 = vld [vmem:[%s1 + $0x50] sm:$0xf]
    %v230 = vld [vmem:[%s1 + $0x58] sm:$0xf]
    %v231 = vld [vmem:[%s1 + $0x60] sm:$0xff]
    %v232 = vld [vmem:[%s1 + $0x68] sm:$0xff]
    %v233 = vld [vmem:[%s1 + $0x70] sm:$0x1f]
    %v234 = vld [vmem:[%s1 + $0x78] sm:$0x1]
    %v235 = vld [vmem:[%s1 + $0x80] sm:$0x1]
    %v236 = vcvt.f32.s32.to.zero.pseudo %v235
    %vm237 = vcmp.gt.s32.totalorder %v236, 0
    %v238 = vsel %vm237, 1, 0
    %v239 = vcvt.s32.f32 %v238
    %vm240 = vcmp.ne.s32.totalorder %v236, 4294967196
    %v241 = vsel %vm240, 1, 0
    %v242 = vcvt.s32.f32 %v241
    %vm243 = vcmp.ge.s32.totalorder %v236, 0
    %v244 = vsel %vm243, 1, 0
    %v245 = vcvt.s32.f32 %v244
    %v246 = vsel %vm109, %v245, 0.0
    %247 = vadd.xlane.f32.xlu0 %v246
    %v248 = vpop.xlane.xlu0 %247
    %v249 = vrot.slane %v248, 4
    %v250 = vadd.f32 %v248, %v249
    %v251 = vrot.slane %v250, 2
    %v252 = vadd.f32 %v250, %v251
    %v253 = vrot.slane %v252, 1
    %v254 = vadd.f32 %v252, %v253
    %s255 = vtos %v254
    %v256 = vstv %s255
    %v257 = vlaneseq
    %v258 = vshrl.u32 %v257, 7
    %v259 = vadd.s32 %v258, 8
    %v260 = vadd.s32 %v258, 16
    %v261 = vadd.s32 %v258, 24
    %v262 = vadd.s32 %v258, 32
    %v263 = vadd.s32 %v258, 40
    %v264 = vadd.s32 %v258, 48
    %v265 = vadd.s32 %v258, 56
    %v266 = vadd.s32 %v258, 64
    %v267 = vadd.s32 %v258, 72
    %v268 = vadd.s32 %v258, 80
    %v269 = vmul.u32 %v236, 4
    %v270 = vlaneseq
    %v271 = vshrl.u32 %v270, 7
    %v272 = vsub.s32 0, %v271
    %v273 = vrot.slane %v269, %v272
    %vm274 = vcmp.ge.s32.totalorder %v258, %v273
    %vm275 = vcmp.ge.s32.totalorder %v259, %v273
    %vm276 = vcmp.ge.s32.totalorder %v260, %v273
    %vm277 = vcmp.ge.s32.totalorder %v261, %v273
    %vm278 = vcmp.ge.s32.totalorder %v262, %v273
    %vm279 = vcmp.ge.s32.totalorder %v263, %v273
    %vm280 = vcmp.ge.s32.totalorder %v264, %v273
    %vm281 = vcmp.ge.s32.totalorder %v265, %v273
    %vm282 = vcmp.ge.s32.totalorder %v266, %v273
    %vm283 = vcmp.ge.s32.totalorder %v267, %v273
    %vm284 = vcmp.ge.s32.totalorder %v268, %v273
    %v285 = vadd.s32 %v269, 4
    %v286 = vlaneseq
    %v287 = vshrl.u32 %v286, 7
    %v288 = vsub.s32 0, %v287
    %v289 = vrot.slane %v285, %v288
    %vm290 = vcmp.lt.s32.totalorder %v258, %v289
    %vm291 = vcmp.lt.s32.totalorder %v259, %v289
    %vm292 = vcmp.lt.s32.totalorder %v260, %v289
    %vm293 = vcmp.lt.s32.totalorder %v261, %v289
    %vm294 = vcmp.lt.s32.totalorder %v262, %v289
    %vm295 = vcmp.lt.s32.totalorder %v263, %v289
    %vm296 = vcmp.lt.s32.totalorder %v264, %v289
    %vm297 = vcmp.lt.s32.totalorder %v265, %v289
    %vm298 = vcmp.lt.s32.totalorder %v266, %v289
    %vm299 = vcmp.lt.s32.totalorder %v267, %v289
    %vm300 = vcmp.lt.s32.totalorder %v268, %v289
    %vm301 = vmand %vm274, %vm290
    %vm302 = vmand %vm275, %vm291
    %vm303 = vmand %vm276, %vm292
    %vm304 = vmand %vm277, %vm293
    %vm305 = vmand %vm278, %vm294
    %vm306 = vmand %vm279, %vm295
    %vm307 = vmand %vm280, %vm296
    %vm308 = vmand %vm281, %vm297
    %vm309 = vmand %vm282, %vm298
    %vm310 = vmand %vm283, %vm299
    %vm311 = vmand %vm284, %vm300
    %v312 = vsel %vm301, 1, 0
    %v313 = vsel %vm302, 1, 0
    %v314 = vsel %vm303, 1, 0
    %v315 = vsel %vm304, 1, 0
    %v316 = vsel %vm305, 1, 0
    %v317 = vsel %vm306, 1, 0
    %v318 = vsel %vm307, 1, 0
    %v319 = vsel %vm308, 1, 0
    %v320 = vsel %vm309, 1, 0
    %v321 = vsel %vm310, 1, 0
    %v322 = vsel %vm311, 1, 0
    %v323 = vcvt.s32.f32 %v312
    %v324 = vcvt.s32.f32 %v313
    %v325 = vcvt.s32.f32 %v314
    %v326 = vcvt.s32.f32 %v315
    %v327 = vcvt.s32.f32 %v316
    %v328 = vcvt.s32.f32 %v317
    %v329 = vcvt.s32.f32 %v318
    %v330 = vcvt.s32.f32 %v319
    %v331 = vcvt.s32.f32 %v320
    %v332 = vcvt.s32.f32 %v321
    %v333 = vcvt.s32.f32 %v322
    %v334 = vand.u32 %v258, 3
    %v335 = vand.u32 %v259, 3
    %v336 = vand.u32 %v260, 3
    %v337 = vand.u32 %v261, 3
    %v338 = vand.u32 %v262, 3
    %v339 = vand.u32 %v263, 3
    %v340 = vand.u32 %v264, 3
    %v341 = vand.u32 %v265, 3
    %v342 = vand.u32 %v266, 3
    %v343 = vand.u32 %v267, 3
    %v344 = vand.u32 %v268, 3
    %vm345 = vcmp.eq.s32.totalorder %v334, 0
    %vm346 = vcmp.eq.s32.totalorder %v335, 0
    %vm347 = vcmp.eq.s32.totalorder %v336, 0
    %vm348 = vcmp.eq.s32.totalorder %v337, 0
    %vm349 = vcmp.eq.s32.totalorder %v338, 0
    %vm350 = vcmp.eq.s32.totalorder %v339, 0
    %vm351 = vcmp.eq.s32.totalorder %v340, 0
    %vm352 = vcmp.eq.s32.totalorder %v341, 0
    %vm353 = vcmp.eq.s32.totalorder %v342, 0
    %vm354 = vcmp.eq.s32.totalorder %v343, 0
    %vm355 = vcmp.eq.s32.totalorder %v344, 0
    %vm356 = vcmp.eq.s32.totalorder %v334, 1
    %vm357 = vcmp.eq.s32.totalorder %v335, 1
    %vm358 = vcmp.eq.s32.totalorder %v336, 1
    %vm359 = vcmp.eq.s32.totalorder %v337, 1
    %vm360 = vcmp.eq.s32.totalorder %v338, 1
    %vm361 = vcmp.eq.s32.totalorder %v339, 1
    %vm362 = vcmp.eq.s32.totalorder %v340, 1
    %vm363 = vcmp.eq.s32.totalorder %v341, 1
    %vm364 = vcmp.eq.s32.totalorder %v342, 1
    %vm365 = vcmp.eq.s32.totalorder %v343, 1
    %vm366 = vcmp.eq.s32.totalorder %v344, 1
    %vm367 = vcmp.eq.s32.totalorder %v334, 2
    %vm368 = vcmp.eq.s32.totalorder %v335, 2
    %vm369 = vcmp.eq.s32.totalorder %v336, 2
    %vm370 = vcmp.eq.s32.totalorder %v337, 2
    %vm371 = vcmp.eq.s32.totalorder %v338, 2
    %vm372 = vcmp.eq.s32.totalorder %v339, 2
    %vm373 = vcmp.eq.s32.totalorder %v340, 2
    %vm374 = vcmp.eq.s32.totalorder %v341, 2
    %vm375 = vcmp.eq.s32.totalorder %v342, 2
    %vm376 = vcmp.eq.s32.totalorder %v343, 2
    %vm377 = vcmp.eq.s32.totalorder %v344, 2
    %v378 = vlaneseq
    %v379 = vshrl.u32 %v378, 7
    %v380 = vsub.s32 2, %v379
    %v381 = vrot.slane %v230, %v380
    %v382 = vlaneseq
    %v383 = vshrl.u32 %v382, 7
    %v384 = vsub.s32 3, %v383
    %v385 = vrot.slane %v230, %v384
    %v386 = vsel %vm367, %v381, %v385
    %v387 = vsel %vm368, %v381, %v385
    %v388 = vsel %vm369, %v381, %v385
    %v389 = vsel %vm370, %v381, %v385
    %v390 = vsel %vm371, %v381, %v385
    %v391 = vsel %vm372, %v381, %v385
    %v392 = vsel %vm373, %v381, %v385
    %v393 = vsel %vm374, %v381, %v385
    %v394 = vsel %vm375, %v381, %v385
    %v395 = vsel %vm376, %v381, %v385
    %v396 = vsel %vm377, %v381, %v385
    %v397 = vlaneseq
    %v398 = vshrl.u32 %v397, 7
    %v399 = vsub.s32 1, %v398
    %v400 = vrot.slane %v230, %v399
    %v401 = vsel %vm356, %v400, %v386
    %v402 = vsel %vm357, %v400, %v387
    %v403 = vsel %vm358, %v400, %v388
    %v404 = vsel %vm359, %v400, %v389
    %v405 = vsel %vm360, %v400, %v390
    %v406 = vsel %vm361, %v400, %v391
    %v407 = vsel %vm362, %v400, %v392
    %v408 = vsel %vm363, %v400, %v393
    %v409 = vsel %vm364, %v400, %v394
    %v410 = vsel %vm365, %v400, %v395
    %v411 = vsel %vm366, %v400, %v396
    %v412 = vlaneseq
    %v413 = vshrl.u32 %v412, 7
    %v414 = vsub.s32 0, %v413
    %v415 = vrot.slane %v230, %v414
    %v416 = vsel %vm345, %v415, %v401
    %v417 = vsel %vm346, %v415, %v402
    %v418 = vsel %vm347, %v415, %v403
    %v419 = vsel %vm348, %v415, %v404
    %v420 = vsel %vm349, %v415, %v405
    %v421 = vsel %vm350, %v415, %v406
    %v422 = vsel %vm351, %v415, %v407
    %v423 = vsel %vm352, %v415, %v408
    %v424 = vsel %vm353, %v415, %v409
    %v425 = vsel %vm354, %v415, %v410
    %v426 = vsel %vm355, %v415, %v411
    %v427 = vlaneseq
    %v428 = vshrl.u32 %v427, 7
    %v429 = vsub.s32 0, %v428
    %v430 = vrot.slane %v239, %v429
    %v431 = vmul.f32 %v323, %v430
    %v432 = vmul.f32 %v324, %v430
    %v433 = vmul.f32 %v325, %v430
    %v434 = vmul.f32 %v326, %v430
    %v435 = vmul.f32 %v327, %v430
    %v436 = vmul.f32 %v328, %v430
    %v437 = vmul.f32 %v329, %v430
    %v438 = vmul.f32 %v330, %v430
    %v439 = vmul.f32 %v331, %v430
    %v440 = vmul.f32 %v332, %v430
    %v441 = vmul.f32 %v333, %v430
    %v442 = vsub.f32 %v219, %v416
    %v443 = vsub.f32 %v220, %v417
    %v444 = vsub.f32 %v221, %v418
    %v445 = vsub.f32 %v222, %v419
    %v446 = vsub.f32 %v223, %v420
    %v447 = vsub.f32 %v224, %v421
    %v448 = vsub.f32 %v225, %v422
    %v449 = vsub.f32 %v226, %v423
    %v450 = vsub.f32 %v227, %v424
    %v451 = vsub.f32 %v228, %v425
    %v452 = vsub.f32 %v229, %v426
    %v453 = vmul.f32 %v431, %v442
    %v454 = vmul.f32 %v432, %v443
    %v455 = vmul.f32 %v433, %v444
    %v456 = vmul.f32 %v434, %v445
    %v457 = vmul.f32 %v435, %v446
    %v458 = vmul.f32 %v436, %v447
    %v459 = vmul.f32 %v437, %v448
    %v460 = vmul.f32 %v438, %v449
    %v461 = vmul.f32 %v439, %v450
    %v462 = vmul.f32 %v440, %v451
    %v463 = vmul.f32 %v441, %v452
    %v464 = vand.u32 2147483647, %v453
    %v465 = vand.u32 2147483647, %v454
    %v466 = vand.u32 2147483647, %v455
    %v467 = vand.u32 2147483647, %v456
    %v468 = vand.u32 2147483647, %v457
    %v469 = vand.u32 2147483647, %v458
    %v470 = vand.u32 2147483647, %v459
    %v471 = vand.u32 2147483647, %v460
    %v472 = vand.u32 2147483647, %v461
    %v473 = vand.u32 2147483647, %v462
    %v474 = vand.u32 2147483647, %v463
    %vm475 = vcmp.lt.f32.partialorder %v464, 1.0
    %vm476 = vcmp.lt.f32.partialorder %v465, 1.0
    %vm477 = vcmp.lt.f32.partialorder %v466, 1.0
    %vm478 = vcmp.lt.f32.partialorder %v467, 1.0
    %vm479 = vcmp.lt.f32.partialorder %v468, 1.0
    %vm480 = vcmp.lt.f32.partialorder %v469, 1.0
    %vm481 = vcmp.lt.f32.partialorder %v470, 1.0
    %vm482 = vcmp.lt.f32.partialorder %v471, 1.0
    %vm483 = vcmp.lt.f32.partialorder %v472, 1.0
    %vm484 = vcmp.lt.f32.partialorder %v473, 1.0
    %vm485 = vcmp.lt.f32.partialorder %v474, 1.0
    %v486 = vmul.f32 %v453, 0.5
    %v487 = vmul.f32 %v454, 0.5
    %v488 = vmul.f32 %v455, 0.5
    %v489 = vmul.f32 %v456, 0.5
    %v490 = vmul.f32 %v457, 0.5
    %v491 = vmul.f32 %v458, 0.5
    %v492 = vmul.f32 %v459, 0.5
    %v493 = vmul.f32 %v460, 0.5
    %v494 = vmul.f32 %v461, 0.5
    %v495 = vmul.f32 %v462, 0.5
    %v496 = vmul.f32 %v463, 0.5
    %v497 = vmul.f32 %v486, %v453
    %v498 = vmul.f32 %v487, %v454
    %v499 = vmul.f32 %v488, %v455
    %v500 = vmul.f32 %v489, %v456
    %v501 = vmul.f32 %v490, %v457
    %v502 = vmul.f32 %v491, %v458
    %v503 = vmul.f32 %v492, %v459
    %v504 = vmul.f32 %v493, %v460
    %v505 = vmul.f32 %v494, %v461
    %v506 = vmul.f32 %v495, %v462
    %v507 = vmul.f32 %v496, %v463
    %v508 = vsub.f32 %v464, 0.5
    %v509 = vsub.f32 %v465, 0.5
    %v510 = vsub.f32 %v466, 0.5
    %v511 = vsub.f32 %v467, 0.5
    %v512 = vsub.f32 %v468, 0.5
    %v513 = vsub.f32 %v469, 0.5
    %v514 = vsub.f32 %v470, 0.5
    %v515 = vsub.f32 %v471, 0.5
    %v516 = vsub.f32 %v472, 0.5
    %v517 = vsub.f32 %v473, 0.5
    %v518 = vsub.f32 %v474, 0.5
    %v519 = vsel %vm475, %v497, %v508
    %v520 = vsel %vm476, %v498, %v509
    %v521 = vsel %vm477, %v499, %v510
    %v522 = vsel %vm478, %v500, %v511
    %v523 = vsel %vm479, %v501, %v512
    %v524 = vsel %vm480, %v502, %v513
    %v525 = vsel %vm481, %v503, %v514
    %v526 = vsel %vm482, %v504, %v515
    %v527 = vsel %vm483, %v505, %v516
    %v528 = vsel %vm484, %v506, %v517
    %v529 = vsel %vm485, %v507, %v518
    %v530 = vadd.f32 %v519, %v520
    %v531 = vadd.f32 %v530, %v521
    %v532 = vadd.f32 %v531, %v522
    %v533 = vadd.f32 %v532, %v523
    %v534 = vadd.f32 %v533, %v524
    %v535 = vadd.f32 %v534, %v525
    %v536 = vadd.f32 %v535, %v526
    %v537 = vadd.f32 %v536, %v527
    %v538 = vadd.f32 %v537, %v528
    %v539 = vsel %vm135, %v529, 0.0
    %v540 = vadd.f32 %v538, %v539
    %541 = vadd.xlane.f32.xlu0 %v540
    %v542 = vpop.xlane.xlu0 %541
    %v543 = vrot.slane %v542, 4
    %v544 = vadd.f32 %v542, %v543
    %v545 = vrot.slane %v544, 2
    %v546 = vadd.f32 %v544, %v545
    %v547 = vrot.slane %v546, 1
    %v548 = vadd.f32 %v546, %v547
    %s549 = vtos %v548
    %v550 = vstv %s549
    %v551 = vrcp.pop %v256
    %v552 = vmul.f32 %v550, %v551
    %vm553 = vcmask 1044480
    %v554 = vsel %vm553, %v233, -inf
    %v555 = vmax.f32 %v231, %v232
    %v556 = vmax.f32 %v555, %v554
    %v557 = vrot.slane %v556, 4
    %v558 = vmax.f32 %v556, %v557
    %v559 = vrot.slane %v558, 2
    %v560 = vmax.f32 %v558, %v559
    %v561 = vrot.slane %v560, 1
    %v562 = vmax.f32 %v560, %v561
    %v563 = vsub.f32 %v231, %v562
    %v564 = vsub.f32 %v232, %v562
    %v565 = vsub.f32 %v233, %v562
    %v566 = vmul.f32 %v563, 1.442695
    %v567 = vpow.pop %v566
    %v568 = vmul.f32 %v564, 1.442695
    %v569 = vpow.pop %v568
    %v570 = vmul.f32 %v565, 1.442695
    %v571 = vpow.pop %v570
    %v572 = vadd.f32 %v567, %v569
    %v573 = vsel %vm553, %v571, 0.0
    %v574 = vadd.f32 %v572, %v573
    %v575 = vrot.slane %v574, 4
    %v576 = vadd.f32 %v574, %v575
    %v577 = vrot.slane %v576, 2
    %v578 = vadd.f32 %v576, %v577
    %v579 = vrot.slane %v578, 1
    %v580 = vadd.f32 %v578, %v579
    %v581 = vlog2.pop %v580
    %v582 = vmul.f32 %v581, 0.6931472
    %v583 = vadd.f32 %v562, %v582
    %vm584 = vcmp.eq.s32.totalorder %v236, 4294967196
    %v585 = vsel %vm584, 0, %v236
    %v586 = vlaneseq
    %v587 = vshrl.u32 %v586, 7
    %v588 = vsub.s32 0, %v587
    %v589 = vrot.slane %v585, %v588
    %vm590 = vcmp.eq.s32.totalorder %v258, %v589
    %vm591 = vcmp.eq.s32.totalorder %v259, %v589
    %vm592 = vcmp.eq.s32.totalorder %v260, %v589
    %v593 = vsel %vm590, 1, 0
    %v594 = vsel %vm591, 1, 0
    %v595 = vsel %vm592, 1, 0
    %v596 = vcvt.s32.f32 %v593
    %v597 = vcvt.s32.f32 %v594
    %v598 = vcvt.s32.f32 %v595
    %v599 = vmul.f32 %v596, %v231
    %v600 = vmul.f32 %v597, %v232
    %v601 = vmul.f32 %v598, %v233
    %v602 = vadd.f32 %v599, %v600
    %v603 = vsel %vm553, %v601, 0.0
    %v604 = vadd.f32 %v602, %v603
    %v605 = vrot.slane %v604, 4
    %v606 = vadd.f32 %v604, %v605
    %v607 = vrot.slane %v606, 2
    %v608 = vadd.f32 %v606, %v607
    %v609 = vrot.slane %v608, 1
    %v610 = vadd.f32 %v608, %v609
    %v611 = vsub.f32 %v583, %v610
    %v612 = vmul.f32 %v611, %v242
    %v613 = vsel %vm109, %v612, 0.0
    %614 = vadd.xlane.f32.xlu0 %v613
    %v615 = vpop.xlane.xlu0 %614
    %v616 = vrot.slane %v615, 4
    %v617 = vadd.f32 %v615, %v616
    %v618 = vrot.slane %v617, 2
    %v619 = vadd.f32 %v617, %v618
    %v620 = vrot.slane %v619, 1
    %v621 = vadd.f32 %v619, %v620
    %s622 = vtos %v621
    %v623 = vstv %s622
    %v624 = vsel %vm109, %v242, 0.0
    %625 = vadd.xlane.f32.xlu0 %v624
    %v626 = vpop.xlane.xlu0 %625
    %v627 = vrot.slane %v626, 4
    %v628 = vadd.f32 %v626, %v627
    %v629 = vrot.slane %v628, 2
    %v630 = vadd.f32 %v628, %v629
    %v631 = vrot.slane %v630, 1
    %v632 = vadd.f32 %v630, %v631
    %s633 = vtos %v632
    %v634 = vstv %s633
    %v635 = vrcp.pop %v634
    %v636 = vmul.f32 %v623, %v635
    %v637 = vrcp.pop %v580
    %v638 = vsub.f32 %v637, %v234
    %v639 = vand.u32 2147483647, %v638
    %v640 = vmul.f32 %v639, %v242
    %v641 = vsel %vm109, %v640, 0.0
    %642 = vadd.xlane.f32.xlu0 %v641
    %v643 = vpop.xlane.xlu0 %642
    %v644 = vrot.slane %v643, 4
    %v645 = vadd.f32 %v643, %v644
    %v646 = vrot.slane %v645, 2
    %v647 = vadd.f32 %v645, %v646
    %v648 = vrot.slane %v647, 1
    %v649 = vadd.f32 %v647, %v648
    %s650 = vtos %v649
    %v651 = vstv %s650
    %v652 = vrcp.pop 128.0
    %v653 = vmul.f32 %v651, %v652
    %v654 = vld [vmem:[#allocation2] sm:$0x1]
    %v655 = vrcp.pop 2048.0
    %v656 = vmul.f32 %v654, %v655
    %v657 = vld [vmem:[#allocation3] sm:$0x1]
    %v658 = vrcp.pop 512.0
    %v659 = vmul.f32 %v657, %v658
    %v660 = vmul.f32 %v656, %v656
    %v661 = vmul.f32 %v660, %v655
    %v662 = vmul.f32 %v659, %v659
    %v663 = vmul.f32 %v662, %v658
    %v664 = vadd.f32 %v661, %v663
    %v665 = vadd.f32 %v150, %v218
    %v666 = vadd.f32 %v665, %v552
    %v667 = vadd.f32 %v666, %v636
    %v668 = vadd.f32 %v667, %v664
    %v669 = vadd.f32 %v668, %v653
    %v670 = vlaneseq
    %v671 = vand.u32 %v670, 127
    %vm672 = vcmp.eq.s32.totalorder %v671, 0
    %v673 = vsel %vm672, %v150, 0.0
    %vm674 = vcmp.eq.s32.totalorder %v671, 1
    %v675 = vsel %vm674, %v218, %v673
    %vm676 = vcmp.eq.s32.totalorder %v671, 2
    %v677 = vsel %vm676, %v552, %v675
    %vm678 = vcmp.eq.s32.totalorder %v671, 3
    %v679 = vsel %vm678, %v636, %v677
    %vm680 = vcmp.eq.s32.totalorder %v671, 4
    %682 = vset.pattern.permute.xlu0 0
    %683 = vperm.xlu0 %682, %v664
    %v684 = vpop.permute.xlu0 %683
    %v686 = vlaneseq
    %v687 = vshrl.u32 %v686, 7
    %v688 = vsub.s32 0, %v687
    %v689 = vrot.slane %v684, %v688
    %v690 = vsel %vm680, %v689, %v679
    %vm691 = vcmp.eq.s32.totalorder %v671, 5
    %v692 = vsel %vm691, %v653, %v690
    %vm693 = vcmp.eq.s32.totalorder %v671, 6
    %695 = vset.pattern.permute.xlu0 0
    %696 = vperm.xlu0 %695, %v669
    %v697 = vpop.permute.xlu0 %696
    %v699 = vlaneseq
    %v700 = vshrl.u32 %v699, 7
    %v701 = vsub.s32 0, %v700
    %v702 = vrot.slane %v697, %v701
    %v703 = vsel %vm693, %v702, %v692
    %704 = vst [vmem:[%s4] sm:$0x1] %v703
  $region25: #{faster_rcnn_trainer_forward.1} parent=0 // pred_fallthru
    _
  // Predicated region
  $region26: #{faster_rcnn_trainer_forward.1} parent=0 // pred_check
    _
  $region27: #{faster_rcnn_trainer_forward.1} parent=0 // pred_check_branch
    %706 = sbr.rel (0) target = $region29
  $region28: #{faster_rcnn_trainer_forward.1} parent=0 // pred_region
    _
  $region29: #{faster_rcnn_trainer_forward.1} parent=0 // pred_fallthru
    _
  // Predicated region
  $region30: #{faster_rcnn_trainer_forward.1} parent=0 // pred_check
    _
  $region31: #{faster_rcnn_trainer_forward.1} parent=0 // pred_check_branch
    %708 = sbr.rel (0) target = $region33
  $region32: #{faster_rcnn_trainer_forward.1} parent=0 // pred_region
    _
  $region33: #{faster_rcnn_trainer_forward.1} parent=0 // pred_fallthru
    _

</llo_original>
